<compile_context>
chip_gen: v6e
topology: v6e:2x2x1
jax: 0.10.0
libtpu: 0.0.40
codegen_flags: <defaults>
</compile_context>

<pallas_src>
import jax
import jax.numpy as jnp
from jax.experimental import pallas as pl
from jax.experimental.pallas import tpu as pltpu

_LANE = 128


def _mish_kernel(x_ref, o_ref):
    """Elementwise Mish on one (TILE_ROWS, 128) VMEM tile."""
    x = x_ref[...].astype(jnp.float32)
    # Numerically stable softplus: max(x, 0) + log1p(exp(-|x|))
    sp = jnp.maximum(x, 0.0) + jnp.log1p(jnp.exp(-jnp.abs(x)))
    o_ref[...] = (x * jnp.tanh(sp)).astype(o_ref.dtype)


def mish(x, *, tile_rows=2048):
    """Pallas Mish: x * tanh(softplus(x)), any shape, returns same shape/dtype."""
    orig_shape = x.shape
    orig_dtype = x.dtype
    n = x.size

    # Flatten and pad to a multiple of the lane width (128).
    xf = jnp.ravel(x)
    n_pad = pl.cdiv(n, _LANE) * _LANE
    if n_pad != n:
        xf = jnp.pad(xf, (0, n_pad - n))
    rows = n_pad // _LANE

    # Row-tile: multiple of 8 (sublane constraint), capped at tile_rows,
    # and at least 8. Pad the row count so the grid divides evenly; padded
    # rows are sliced off afterwards (elementwise op, no cross-row deps).
    tr = min(tile_rows, max(rows, 8))
    tr = max(8, (tr // 8) * 8)
    rows_pad = pl.cdiv(rows, tr) * tr
    if rows_pad != rows:
        xf = jnp.pad(xf, (0, (rows_pad - rows) * _LANE))

    x2 = xf.reshape(rows_pad, _LANE)
    grid = (rows_pad // tr,)

    out2 = pl.pallas_call(
        _mish_kernel,
        out_shape=jax.ShapeDtypeStruct((rows_pad, _LANE), orig_dtype),
        grid_spec=pltpu.PrefetchScalarGridSpec(
            num_scalar_prefetch=0,
            grid=grid,
            in_specs=[pl.BlockSpec((tr, _LANE), lambda i: (i, 0))],
            out_specs=pl.BlockSpec((tr, _LANE), lambda i: (i, 0)),
        ),
        compiler_params=pltpu.CompilerParams(
            dimension_semantics=("parallel",),  # independent tiles -> megacore-friendly
        ),
    )(x2)

    return out2.reshape(-1)[:n].reshape(orig_shape)


def _mish_ref(x):
    """Pure-JAX reference matching the PyTorch module."""
    xf = x.astype(jnp.float32)
    return (xf * jnp.tanh(jax.nn.softplus(xf))).astype(x.dtype)


if __name__ == "__main__":
    key = jax.random.PRNGKey(0)
    # Small NCHW-ish input consistent with typical Mish usage.
    x = jax.random.normal(key, (2, 4, 16, 16), dtype=jnp.float32) * 3.0

    out = mish(x)
    jax.block_until_ready(out)

    ref = _mish_ref(x)
    assert out.shape == x.shape and out.dtype == x.dtype
    assert jnp.allclose(out, ref, rtol=1e-5, atol=1e-5), (
        float(jnp.max(jnp.abs(out - ref))),
    )

    print("KERNEL_OK")
</pallas_src>

<mosaic_0001>
module attributes {stable_mosaic.version = 11 : i64} {
  func.func @_mish_kernel(%arg0: i32, %arg1: memref<16x128xf32, #tpu.memory_space<vmem>>, %arg2: memref<16x128xf32, #tpu.memory_space<vmem>>) attributes {dimension_semantics = [#tpu.dimension_semantics<parallel>], iteration_bounds = array<i64: 1>, scalar_prefetch = 0 : i64, scratch_operands = 0 : i64, tpu.core_type = #tpu.core_type<tc>, window_params = [{transform_indices = @transform_0, window_bounds = array<i64: 16, 128>}, {transform_indices = @transform_1, window_bounds = array<i64: 16, 128>}]} {
    %c0 = arith.constant 0 : index
    %c0_0 = arith.constant 0 : index
    %0 = vector.load %arg1[%c0, %c0_0] : memref<16x128xf32, #tpu.memory_space<vmem>>, vector<16x128xf32>
    %cst = arith.constant 0.000000e+00 : f32
    %1 = vector.broadcast %cst : f32 to vector<16x128xf32>
    %2 = arith.maximumf %0, %1 : vector<16x128xf32>
    %3 = math.absf %0 : vector<16x128xf32>
    %cst_1 = arith.constant 0.000000e+00 : f32
    %4 = vector.broadcast %cst_1 : f32 to vector<16x128xf32>
    %5 = arith.subf %4, %3 : vector<16x128xf32>
    %6 = math.exp %5 : vector<16x128xf32>
    %7 = math.log1p %6 : vector<16x128xf32>
    %8 = arith.addf %2, %7 : vector<16x128xf32>
    %9 = math.tanh %8 : vector<16x128xf32>
    %10 = arith.mulf %0, %9 : vector<16x128xf32>
    %c0_2 = arith.constant 0 : index
    %c0_3 = arith.constant 0 : index
    %11 = vector.load %arg2[%c0_2, %c0_3] : memref<16x128xf32, #tpu.memory_space<vmem>>, vector<16x128xf32>
    tpu.vector_store %arg2[%c0_2, %c0_3], %10 {strides = array<i32>} : memref<16x128xf32, #tpu.memory_space<vmem>>, vector<16x128xf32>,
    return
  }
  func.func @transform_0(%arg0: i32) -> (i32, i32) {
    %c0_i32 = arith.constant 0 : i32
    %c0_i32_0 = arith.constant 0 : i32
    return %arg0, %c0_i32 : i32, i32
  }
  func.func @transform_1(%arg0: i32) -> (i32, i32) {
    %c0_i32 = arith.constant 0 : i32
    %c0_i32_0 = arith.constant 0 : i32
    return %arg0, %c0_i32 : i32, i32
  }
}

</mosaic_0001>

<llo_original>
// kernel: tpu_custom_call.1
$region0: #{tpu_custom_call.1}
  #allocation0 [shape = 'u32[]', space=smem, size = 0x4, offset = 0x4, fixed_abs, tag = 'smem constant byte address 0x4 - core index']
  #allocation1 [shape = 'u32[144,128]{1,0:T(1,128)}', space=vmem, size = 0x12000, scoped, tag = 'internal scratch']
  %s0 = inlined_call_operand.hbm [shape: f32[16,128], index: 0, kind: input, shape index: {}]
  %s1 = inlined_call_operand.hbm [shape: f32[16,128], index: 1, kind: output, shape index: {}]
  %s2 = sld [smem:[#allocation0]]
  $region18: #{tpu_custom_call.1} parent=0
    _
  %s4 = ssub.s32 1, %s2
  %s5 = scalar_select 0, %s4, %s2
  $region1: #{tpu_custom_call.1} parent=0
    #allocation2 [shape = 'u8[8192]{0}', space=vmem, size = 0x2000, scoped, tag = 'input window, operand 0, single buffered']
    #allocation3 [shape = 's32[1]{0}', space=sflag, size = 0x4, scoped, tag = 'scoped memory for tpu_custom_call.1']
    #allocation4 [shape = 's32[1]{0}', space=sflag, size = 0x4, scoped, tag = 'scoped memory for tpu_custom_call.1']
    #allocation5 [shape = 'u8[8192]{0}', space=vmem, size = 0x2000, scoped, tag = 'output window, operand 0, single buffered']
    %6 = vsyncpa [#allocation3], 0
    %7 = vsyncpa [#allocation4], 0
    // Predicated region
    $region2: #{tpu_custom_call.1} parent=1 // pred_check
      _
    $region3: #{tpu_custom_call.1} parent=1 // pred_check_branch
      %9 = sbr.rel (0) target = $region5
    $region4: #{tpu_custom_call.1} parent=1 // pred_region
      %s11 = ssub.s32 256, 256
      %12 = vsyncadd [#allocation3], %s11
      %s13 = sshll.u32 [#allocation2], 4
      %s14 = int_to_ptr.vmem [resolvable:$true] %s13
      %19 = dma.hbm_to_vmem [thread:$0]  %s0, 256, %s14, [#allocation3], 128, 128, 8
    $region5: #{tpu_custom_call.1} parent=1 // pred_fallthru
      _
    // Predicated region
    $region6: #{tpu_custom_call.1} parent=1 // pred_check
      _
    $region7: #{tpu_custom_call.1} parent=1 // pred_check_branch
      %21 = sbr.rel (0) target = $region9
    $region8: #{tpu_custom_call.1} parent=1 // pred_region
      %22 = dma.done [#allocation3], 256
    $region9: #{tpu_custom_call.1} parent=1 // pred_fallthru
      _
    %v23 = vld [vmem:[#allocation2] sm:$0xff]
    %v24 = vld [vmem:[#allocation2 + $0x8] sm:$0xff]
    %v25 = vmax.f32 %v23, 0.0
    %v26 = vmax.f32 %v24, 0.0
    %v27 = vand.u32 2147483647, %v23
    %v28 = vand.u32 2147483647, %v24
    %v29 = vsub.f32 0.0, %v27
    %v30 = vsub.f32 0.0, %v28
    %v31 = vmul.f32 %v29, 1.442695
    %v32 = vpow.pop %v31
    %v33 = vmul.f32 %v30, 1.442695
    %v34 = vpow.pop %v33
    %v35 = vadd.f32 %v32, 1.0
    %v36 = vlog2.pop %v35
    %v37 = vmul.f32 %v36, 0.6931472
    %v38 = vmul.f32 -0.5, %v32
    %v39 = vadd.f32 %v38, 1.0
    %v40 = vmul.f32 %v39, %v32
    %v41 = vand.u32 2147483647, %v32
    %vm42 = vcmp.lt.f32.partialorder %v41, 0.0004427343
    %v43 = vsel %vm42, %v40, %v37
    %v44 = vadd.f32 %v34, 1.0
    %v45 = vlog2.pop %v44
    %v46 = vmul.f32 %v45, 0.6931472
    %v47 = vmul.f32 -0.5, %v34
    %v48 = vadd.f32 %v47, 1.0
    %v49 = vmul.f32 %v48, %v34
    %v50 = vand.u32 2147483647, %v34
    %vm51 = vcmp.lt.f32.partialorder %v50, 0.0004427343
    %v52 = vsel %vm51, %v49, %v46
    %v53 = vadd.f32 %v25, %v43
    %v54 = vadd.f32 %v26, %v52
    %v55 = vtanh.pop %v53
    %v56 = vtanh.pop %v54
    %v57 = vmul.f32 %v23, %v55
    %v58 = vmul.f32 %v24, %v56
    %59 = vst [vmem:[#allocation5] sm:$0xff] %v57
    %60 = vst [vmem:[#allocation5 + $0x8] sm:$0xff] %v58
    // Predicated region
    $region10: #{tpu_custom_call.1} parent=1 // pred_check
      _
    $region11: #{tpu_custom_call.1} parent=1 // pred_check_branch
      %62 = sbr.rel (0) target = $region13
    $region12: #{tpu_custom_call.1} parent=1 // pred_region
      %s64 = ssub.s32 256, 256
      %65 = vsyncadd [#allocation4], %s64
      %s66 = sshll.u32 [#allocation5], 4
      %s67 = int_to_ptr.vmem [resolvable:$true] %s66
      %72 = dma.vmem_to_hbm [thread:$0]  %s67, 256, %s1, [#allocation4], 128, 128, 8
    $region13: #{tpu_custom_call.1} parent=1 // pred_fallthru
      _
    // Predicated region
    $region14: #{tpu_custom_call.1} parent=1 // pred_check
      _
    $region15: #{tpu_custom_call.1} parent=1 // pred_check_branch
      %74 = sbr.rel (0) target = $region17
    $region16: #{tpu_custom_call.1} parent=1 // pred_region
      %75 = dma.done [#allocation4], 256
    $region17: #{tpu_custom_call.1} parent=1 // pred_fallthru
      _
    %76 = vsyncpa [#allocation3], 1
    %77 = vsyncpa [#allocation4], 1

</llo_original>
